<compile_context>
chip_gen: v5e
topology: v5e:2x2
jax: 0.10.0
libtpu: 0.0.40
codegen_flags: <defaults>
</compile_context>

<pallas_src>
import functools

import jax
import jax.numpy as jnp
from jax import lax
from jax.experimental import pallas as pl
from jax.experimental.pallas import tpu as pltpu


# ---------------------------------------------------------------------------
# Small-table path: table resident in VMEM, one-hot MXU gather.
# ---------------------------------------------------------------------------
def _onehot_kernel(idx_ref, table_ref, *rest, noise_std, training):
    if training:
        noise_ref, out_ref = rest
    else:
        (out_ref,) = rest

    v = table_ref.shape[0]
    tm = out_ref.shape[0]

    ids = jnp.clip(idx_ref[...], 0, v - 1)                       # (tm, 1) int32
    onehot = (ids == lax.broadcasted_iota(jnp.int32, (tm, v), 1))
    onehot = onehot.astype(table_ref.dtype)
    # HIGHEST precision keeps the one-hot gather bit-exact for f32 tables
    # (the selected row is reconstructed exactly from the multi-pass matmul).
    emb = jnp.dot(onehot, table_ref[...],
                  preferred_element_type=jnp.float32,
                  precision=jax.lax.Precision.HIGHEST)            # (tm, D) f32

    if training:
        emb = emb + noise_ref[...] * noise_std
    out_ref[...] = emb.astype(out_ref.dtype)


# ---------------------------------------------------------------------------
# Large-table path: HBM-resident table, per-row DMA gather (double-buffered).
# ---------------------------------------------------------------------------
def _dma_gather_kernel(idx_ref, table_ref, *rest, noise_std, training, tm):
    if training:
        noise_ref, out_ref, row_buf, sems = rest
    else:
        out_ref, row_buf, sems = rest

    i = pl.program_id(0)
    n_tiles = pl.num_programs(0)
    slot = i % 2
    vocab = table_ref.shape[0]

    def issue_tile(tile_idx, slot_idx):
        base = tile_idx * tm

        def issue_row(j, carry):
            tok = jnp.clip(idx_ref[base + j], 0, vocab - 1)       # SMEM scalar read
            pltpu.make_async_copy(table_ref.at[tok],              # (D,) row in HBM
                                  row_buf.at[slot_idx, j],
                                  sems.at[slot_idx]).start()
            return carry

        # Unrolled issue loop: descriptor stream is visible to the scheduler.
        lax.fori_loop(0, tm, issue_row, 0, unroll=8)

    # Prime the pipeline on the first step.
    @pl.when(i == 0)
    def _():
        issue_tile(0, 0)

    # Prefetch the next tile's rows into the other slot while this one is used.
    @pl.when(i + 1 < n_tiles)
    def _():
        issue_tile(i + 1, 1 - slot)

    # One wait for the whole tile: each of the tm row copies signaled
    # D*itemsize bytes on sems[slot]; this descriptor covers tm*D*itemsize
    # bytes, so a single wait balances them (removes tm-1 blocking waits).
    pltpu.make_async_copy(table_ref.at[pl.ds(0, tm)], row_buf.at[slot],
                          sems.at[slot]).wait()

    if training:
        emb = row_buf[slot].astype(jnp.float32) + noise_ref[...] * noise_std
        out_ref[...] = emb.astype(out_ref.dtype)
    else:
        out_ref[...] = row_buf[slot]          # eval: no f32 round trip


# ---------------------------------------------------------------------------
# Wrappers
# ---------------------------------------------------------------------------
_MAX_PREFETCH_TOKENS = 64 * 1024          # 1-D SMEM id array pads to next_pow2(4N)
_VMEM_TABLE_BYTES_MAX = 4 * 1024 * 1024   # keep the resident table comfortably small
_VMEM_TABLE_VOCAB_MAX = 2048


def _round_up(x, m):
    return ((x + m - 1) // m) * m


def _device_kind():
    try:
        return jax.devices()[0].device_kind.lower()
    except Exception:
        return ""


def _gather_vmem(idx_flat, noise_flat, table, *, noise_std, training):
    """Small-vocab path: table resident in VMEM, one-hot MXU gather."""
    (n,) = idx_flat.shape
    v, d = table.shape

    tm = min(256, _round_up(n, 8))
    n_pad = _round_up(n, tm)
    if n_pad != n:
        idx_flat = jnp.pad(idx_flat, (0, n_pad - n))
        if training:
            noise_flat = jnp.pad(noise_flat, ((0, n_pad - n), (0, 0)))
    idx2d = idx_flat.reshape(n_pad, 1)
    n_tiles = n_pad // tm

    kernel = functools.partial(_onehot_kernel, noise_std=float(noise_std),
                               training=bool(training))

    in_specs = [
        pl.BlockSpec((tm, 1), lambda i: (i, 0)),      # token ids (lane-dense-ish)
        pl.BlockSpec((v, d), lambda i: (0, 0)),       # full table, resident in VMEM
    ]
    args = [idx2d, table]
    if training:
        in_specs.append(pl.BlockSpec((tm, d), lambda i: (i, 0)))   # noise tile
        args.append(noise_flat)

    out_bytes = jnp.dtype(table.dtype).itemsize
    needed = (v * d * out_bytes                                   # resident table
              + 2 * tm * d * (out_bytes + (4 if training else 0)) # out/noise dbl-buf
              + tm * (v + 2 * d) * 4)                             # one-hot + f32 temps
    vmem_limit = int(min(48 * 1024 * 1024,
                         max(32 * 1024 * 1024, needed + 8 * 1024 * 1024)))

    out_flat = pl.pallas_call(
        kernel,
        out_shape=jax.ShapeDtypeStruct((n_pad, d), table.dtype),
        grid=(n_tiles,),
        in_specs=in_specs,
        out_specs=pl.BlockSpec((tm, d), lambda i: (i, 0)),
        compiler_params=pltpu.CompilerParams(
            dimension_semantics=("parallel",),   # independent tiles -> both TCs on v7x
            vmem_limit_bytes=vmem_limit,
        ),
    )(*args)
    return out_flat[:n]


def _gather_dma_one(idx_flat, noise_flat, table, *, noise_std, training, tm,
                    vmem_limit):
    (n,) = idx_flat.shape
    v, d = table.shape
    n_pad = _round_up(n, tm)
    if n_pad != n:
        idx_flat = jnp.pad(idx_flat, (0, n_pad - n))      # pad with token 0 (valid row)
        if training:
            noise_flat = jnp.pad(noise_flat, ((0, n_pad - n), (0, 0)))
    n_tiles = n_pad // tm

    kernel = functools.partial(_dma_gather_kernel, noise_std=float(noise_std),
                               training=bool(training), tm=tm)

    in_specs = [pl.BlockSpec(memory_space=pl.ANY)]        # table stays in HBM
    args = [idx_flat, table]
    if training:
        in_specs.append(pl.BlockSpec((tm, d), lambda i, idx: (i, 0)))
        args.append(noise_flat)

    out_flat = pl.pallas_call(
        kernel,
        out_shape=jax.ShapeDtypeStruct((n_pad, d), table.dtype),
        grid_spec=pltpu.PrefetchScalarGridSpec(
            num_scalar_prefetch=1,                        # token ids -> SMEM
            grid=(n_tiles,),
            in_specs=in_specs,
            out_specs=pl.BlockSpec((tm, d), lambda i, idx: (i, 0)),
            scratch_shapes=[
                pltpu.VMEM((2, tm, d), table.dtype),      # double-buffered row gather
                pltpu.SemaphoreType.DMA((2,)),            # one DMA sem per slot
            ],
        ),
        compiler_params=pltpu.CompilerParams(
            # Cross-step row prefetch makes this axis stateful.  On v7x a
            # leading "parallel" token-range axis (or pl.core_map) would let
            # both TensorCores run their own gather stream.
            dimension_semantics=("arbitrary",),
            vmem_limit_bytes=int(vmem_limit),
        ),
    )(*args)
    return out_flat[:n]


def _gather_dma(idx_flat, noise_flat, table, *, noise_std, training):
    """Large-vocab path: rows gathered with per-token DMAs from HBM."""
    (n,) = idx_flat.shape
    v, d = table.shape
    tab_bytes = jnp.dtype(table.dtype).itemsize

    kind = _device_kind()
    big_vmem = ("v5" in kind) or ("v6" in kind)           # 128 MiB VMEM parts
    budget = (80 if big_vmem else 36) * 1024 * 1024       # conservative on v7x (64 MiB)
    vmem_cap = (100 if big_vmem else 48) * 1024 * 1024

    # Per-token VMEM bytes: 2x gather buffer + 2x pipelined output
    # (+ 2x pipelined f32 noise + f32 temporaries when training).
    per_tok = d * (2 * tab_bytes + 2 * tab_bytes
                   + ((2 + 2) * 4 if training else 0))
    tm_max = 512 if big_vmem else 256
    tm = max(8, min(tm_max, (budget // max(per_tok, 1)) // 8 * 8))
    tm = min(tm, _round_up(n, 8))
    vmem_limit = min(vmem_cap, max(32 * 1024 * 1024,
                                   tm * per_tok + 8 * 1024 * 1024))

    # Chunk at the wrapper so the scalar-prefetched id array stays well inside
    # SMEM (1-D SMEM arrays pad to next_pow2(4N) bytes).
    chunk = _round_up(min(n, _MAX_PREFETCH_TOKENS), tm)
    outs = []
    for start in range(0, n, chunk):
        stop = min(n, start + chunk)
        outs.append(_gather_dma_one(
            idx_flat[start:stop],
            noise_flat[start:stop] if training else None,
            table, noise_std=noise_std, training=training,
            tm=tm, vmem_limit=vmem_limit))
    return outs[0] if len(outs) == 1 else jnp.concatenate(outs, axis=0)


def noisy_embedding(indices, table, *, noise_std=0.01, training=True,
                    rng_key=None, noise=None):
    """Forward pass of NoisyEmbedding.

    indices: (B, S) integer ids; table: (V, D) embedding weight.
    In training mode adds N(0,1)*noise_std noise (either `noise` of shape
    (B, S, D) or drawn internally from `rng_key`).
    """
    B, S = indices.shape
    V, D = table.shape
    N = B * S

    idx_flat = indices.reshape(N).astype(jnp.int32)

    if training:
        if noise is None:
            if rng_key is None:
                rng_key = jax.random.PRNGKey(0)
            noise = jax.random.normal(rng_key, (B, S, D), dtype=jnp.float32)
        noise_flat = noise.reshape(N, D).astype(jnp.float32)
    else:
        noise_flat = None

    table_bytes = V * D * jnp.dtype(table.dtype).itemsize
    use_vmem_path = (table_bytes <= _VMEM_TABLE_BYTES_MAX
                     and V <= _VMEM_TABLE_VOCAB_MAX)

    if use_vmem_path:
        out_flat = _gather_vmem(idx_flat, noise_flat, table,
                                noise_std=noise_std, training=training)
    else:
        out_flat = _gather_dma(idx_flat, noise_flat, table,
                               noise_std=noise_std, training=training)
    return out_flat.reshape(B, S, D)


if __name__ == "__main__":
    # Small deterministic example: batch=2, seq=8, vocab=32, hidden=128.
    B, S, V, D = 2, 8, 32, 128
    noise_std = 0.01

    key = jax.random.PRNGKey(0)
    k_tab, k_idx, k_noise = jax.random.split(key, 3)

    table = jax.random.normal(k_tab, (V, D), dtype=jnp.float32)
    indices = jax.random.randint(k_idx, (B, S), 0, V, dtype=jnp.int32)
    noise = jax.random.normal(k_noise, (B, S, D), dtype=jnp.float32)

    # Training mode with explicit noise -> exact reference.
    out = noisy_embedding(indices, table, noise_std=noise_std,
                          training=True, noise=noise)
    out = jax.block_until_ready(out)
    assert out.shape == (B, S, D)
    assert bool(jnp.all(jnp.isfinite(out)))

    ref_train = table[indices] + noise * noise_std
    assert jnp.allclose(out, ref_train, atol=1e-5, rtol=0.0), "training mismatch"

    # Training mode with internally generated noise -> check statistics only.
    out_gen = jax.block_until_ready(
        noisy_embedding(indices, table, noise_std=noise_std, training=True,
                        rng_key=jax.random.PRNGKey(1)))
    diff = (out_gen - table[indices]).astype(jnp.float32)
    assert abs(float(jnp.mean(diff))) < 5e-3
    measured_std = float(jnp.std(diff))
    assert 0.5 * noise_std < measured_std < 1.5 * noise_std

    # Eval mode: must match the plain embedding lookup.
    out_eval = jax.block_until_ready(
        noisy_embedding(indices, table, noise_std=noise_std, training=False))
    assert jnp.allclose(out_eval, table[indices], atol=1e-6, rtol=0.0)

    print("KERNEL_OK")
</pallas_src>

<mosaic_0001>
module attributes {stable_mosaic.version = 11 : i64} {
  func.func @_onehot_kernel(%arg0: i32, %arg1: memref<16x1xi32, #tpu.memory_space<vmem>>, %arg2: memref<32x128xf32, #tpu.memory_space<vmem>>, %arg3: memref<16x128xf32, #tpu.memory_space<vmem>>, %arg4: memref<16x128xf32, #tpu.memory_space<vmem>>) attributes {dimension_semantics = [#tpu.dimension_semantics<parallel>], iteration_bounds = array<i64: 1>, scalar_prefetch = 0 : i64, scratch_operands = 0 : i64, tpu.core_type = #tpu.core_type<tc>, window_params = [{transform_indices = @transform_0, window_bounds = array<i64: 16, 1>}, {pipeline_mode = #tpu.pipeline_mode<synchronous>, transform_indices = @transform_1, window_bounds = array<i64: 32, 128>}, {transform_indices = @transform_2, window_bounds = array<i64: 16, 128>}, {transform_indices = @transform_3, window_bounds = array<i64: 16, 128>}]} {
    %c0 = arith.constant 0 : index
    %c0_0 = arith.constant 0 : index
    %0 = vector.load %arg1[%c0, %c0_0] : memref<16x1xi32, #tpu.memory_space<vmem>>, vector<16x1xi32>
    %c0_i32 = arith.constant 0 : i32
    %c31_i32 = arith.constant 31 : i32
    %1 = vector.broadcast %c0_i32 : i32 to vector<16x1xi32>
    %2 = arith.maxsi %1, %0 : vector<16x1xi32>
    %3 = vector.broadcast %c31_i32 : i32 to vector<16x1xi32>
    %4 = arith.minsi %3, %2 : vector<16x1xi32>
    %5 = tpu.iota {dimensions = array<i32: 1>} : vector<16x32xi32>
    %6 = vector.broadcast %4 : vector<16x1xi32> to vector<16x32xi32>
    %7 = arith.cmpi eq, %6, %5 : vector<16x32xi32>
    %8 = arith.extui %7 : vector<16x32xi1> to vector<16x32xi32>
    %9 = arith.sitofp %8 : vector<16x32xi32> to vector<16x32xf32>
    %c0_1 = arith.constant 0 : index
    %c0_2 = arith.constant 0 : index
    %10 = vector.load %arg2[%c0_1, %c0_2] : memref<32x128xf32, #tpu.memory_space<vmem>>, vector<32x128xf32>
    %cst = arith.constant dense<0.000000e+00> : vector<16x128xf32>
    %11 = tpu.matmul %9, %10, %cst {dimension_numbers = #tpu.dot_dimension_numbers<[1], [0], [0], [1], [0, 0, 1, 1], [], []>, precision = #tpu.contract_precision<fp32>} : vector<16x32xf32>, vector<32x128xf32>, vector<16x128xf32> -> vector<16x128xf32>
    %c0_3 = arith.constant 0 : index
    %c0_4 = arith.constant 0 : index
    %12 = vector.load %arg3[%c0_3, %c0_4] : memref<16x128xf32, #tpu.memory_space<vmem>>, vector<16x128xf32>
    %cst_5 = arith.constant 0.00999999977 : f32
    %13 = vector.broadcast %cst_5 : f32 to vector<16x128xf32>
    %14 = arith.mulf %12, %13 : vector<16x128xf32>
    %15 = arith.addf %11, %14 : vector<16x128xf32>
    %c0_6 = arith.constant 0 : index
    %c0_7 = arith.constant 0 : index
    %16 = vector.load %arg4[%c0_6, %c0_7] : memref<16x128xf32, #tpu.memory_space<vmem>>, vector<16x128xf32>
    tpu.vector_store %arg4[%c0_6, %c0_7], %15 {strides = array<i32>} : memref<16x128xf32, #tpu.memory_space<vmem>>, vector<16x128xf32>,
    return
  }
  func.func @transform_0(%arg0: i32) -> (i32, i32) {
    %c0_i32 = arith.constant 0 : i32
    %c0_i32_0 = arith.constant 0 : i32
    return %arg0, %c0_i32 : i32, i32
  }
  func.func @transform_1(%arg0: i32) -> (i32, i32) {
    %c0_i32 = arith.constant 0 : i32
    %c0_i32_0 = arith.constant 0 : i32
    %c0_i32_1 = arith.constant 0 : i32
    return %c0_i32, %c0_i32_0 : i32, i32
  }
  func.func @transform_2(%arg0: i32) -> (i32, i32) {
    %c0_i32 = arith.constant 0 : i32
    %c0_i32_0 = arith.constant 0 : i32
    return %arg0, %c0_i32 : i32, i32
  }
  func.func @transform_3(%arg0: i32) -> (i32, i32) {
    %c0_i32 = arith.constant 0 : i32
    %c0_i32_0 = arith.constant 0 : i32
    return %arg0, %c0_i32 : i32, i32
  }
}

</mosaic_0001>

<llo_original>
// kernel: tpu_custom_call.1
$region0: #{tpu_custom_call.1}
  #allocation0 [shape = 'u32[]', space=smem, size = 0x4, offset = 0x4, fixed_abs, tag = 'smem constant byte address 0x4 - core index']
  #allocation1 [shape = 'u32[72,128]{1,0:T(1,128)}', space=vmem, size = 0x9000, scoped, tag = 'internal scratch']
  %s0 = inlined_call_operand.vmem [shape: s32[16,1], index: 0, kind: input, shape index: {}]
  %s1 = inlined_call_operand.hbm [shape: f32[32,128], index: 1, kind: input, shape index: {}]
  %s2 = inlined_call_operand.vmem [shape: f32[16,128], index: 2, kind: input, shape index: {}]
  %s3 = inlined_call_operand.hbm [shape: f32[16,128], index: 3, kind: output, shape index: {}]
  %s4 = sld [smem:[#allocation0]]
  $region26: #{tpu_custom_call.1} parent=0
    _
  %s6 = ssub.s32 1, %s4
  %s7 = scalar_select 0, %s6, %s4
  $region1: #{tpu_custom_call.1} parent=0
    #allocation2 [shape = 'u8[16384]{0}', space=vmem, size = 0x4000, scoped, tag = 'input window, operand 1, single buffered']
    #allocation3 [shape = 's32[1]{0}', space=sflag, size = 0x4, scoped, tag = 'scoped memory for tpu_custom_call.1']
    #allocation4 [shape = 's32[1]{0}', space=sflag, size = 0x4, scoped, tag = 'scoped memory for tpu_custom_call.1']
    #allocation5 [shape = 'u8[8192]{0}', space=vmem, size = 0x2000, scoped, tag = 'output window, operand 0, single buffered']
    %8 = vsyncpa [#allocation3], 0
    %9 = vsyncpa [#allocation4], 0
    // Predicated region
    $region2: #{tpu_custom_call.1} parent=1 // pred_check
      _
    $region3: #{tpu_custom_call.1} parent=1 // pred_check_branch
      %11 = sbr.rel (0) target = $region5
    $region4: #{tpu_custom_call.1} parent=1 // pred_region
      _
    $region5: #{tpu_custom_call.1} parent=1 // pred_fallthru
      _
    // Predicated region
    $region6: #{tpu_custom_call.1} parent=1 // pred_check
      _
    $region7: #{tpu_custom_call.1} parent=1 // pred_check_branch
      %13 = sbr.rel (0) target = $region9
    $region8: #{tpu_custom_call.1} parent=1 // pred_region
      %15 = vsyncadd [#allocation3], 0
      %s16 = sshll.u32 %s1, 4
      %s17 = int_to_ptr.hbm [resolvable:$true] %s16
      %s18 = sshll.u32 [#allocation2], 4
      %s19 = int_to_ptr.vmem [resolvable:$true] %s18
      %24 = dma.hbm_to_vmem [thread:$0]  %s17, 512, %s19, [#allocation3], 128, 128, 8
    $region9: #{tpu_custom_call.1} parent=1 // pred_fallthru
      _
    // Predicated region
    $region10: #{tpu_custom_call.1} parent=1 // pred_check
      _
    $region11: #{tpu_custom_call.1} parent=1 // pred_check_branch
      %26 = sbr.rel (0) target = $region13
    $region12: #{tpu_custom_call.1} parent=1 // pred_region
      _
    $region13: #{tpu_custom_call.1} parent=1 // pred_fallthru
      _
    // Predicated region
    $region14: #{tpu_custom_call.1} parent=1 // pred_check
      _
    $region15: #{tpu_custom_call.1} parent=1 // pred_check_branch
      %28 = sbr.rel (0) target = $region17
    $region16: #{tpu_custom_call.1} parent=1 // pred_region
      %30 = dma.done [#allocation3], 512
    $region17: #{tpu_custom_call.1} parent=1 // pred_fallthru
      _
    %v31 = vld [vmem:[%s0] sm:$0xff]
    %v32 = vld [vmem:[%s0 + $0x8] sm:$0xff]
    %vm33 = vcmp.gt.s32.totalorder %v31, 0
    %v34 = vsel %vm33, %v31, 0
    %vm35 = vcmp.gt.s32.totalorder %v32, 0
    %v36 = vsel %vm35, %v32, 0
    %vm37 = vcmp.lt.s32.totalorder %v34, 31
    %v38 = vsel %vm37, %v34, 31
    %vm39 = vcmp.lt.s32.totalorder %v36, 31
    %v40 = vsel %vm39, %v36, 31
    %v41 = vlaneseq
    %v42 = vand.u32 %v41, 127
    %43 = vset.pattern.permute.xlu0 0
    %44 = vperm.xlu0 %43, %v38
    %v45 = vpop.permute.xlu0 %44
    %46 = vset.pattern.permute.xlu0 0
    %47 = vperm.xlu0 %46, %v40
    %v48 = vpop.permute.xlu0 %47
    %vm49 = vcmp.eq.s32.totalorder %v45, %v42
    %vm50 = vcmp.eq.s32.totalorder %v48, %v42
    %v51 = vsel %vm49, 1, 0
    %v52 = vsel %vm50, 1, 0
    %v53 = vcvt.s32.f32 %v51
    %v54 = vcvt.s32.f32 %v52
    %v55 = vld [vmem:[#allocation2] sm:$0xff]
    %v56 = vld [vmem:[#allocation2 + $0x8] sm:$0xff]
    %v57 = vld [vmem:[#allocation2 + $0x10] sm:$0xff]
    %v58 = vld [vmem:[#allocation2 + $0x18] sm:$0xff]
    %v59 = vld [vmem:[%s2] sm:$0xff]
    %v60 = vld [vmem:[%s2 + $0x8] sm:$0xff]
    %v61 = vmul.f32 %v59, 0.01
    %v62 = vmul.f32 %v60, 0.01
    %vm63 = vcmask 261120
    %v65 = vsel %vm63, %v53, 0
    %v68 = vsel %vm63, %v54, 0
    %70 = vmatpush.msra.mxu0 0.0
    %71 = vmatpush.msra.mxu0 0.0
    %72 = vmatpush.msra.mxu0 0.0
    %73 = vmatpush.msra.mxu0 0.0
    %74 = vmatpush.msra.mxu0 0.0
    %75 = vmatpush.msra.mxu0 0.0
    %76 = vmatpush.msra.mxu0 0.0
    %77 = vmatpush.msra.mxu0 0.0
    %78 = vmatpush.msra.mxu0 0.0
    %79 = vmatpush.msra.mxu0 0.0
    %80 = vmatpush.msra.mxu0 0.0
    %81 = vmatpush.msra.mxu0 0.0
    %v82 = vand.u32 %v58, 4294901760
    %83 = vmatpush.msra.mxu0 %v82
    %v84 = vand.u32 %v57, 4294901760
    %85 = vmatpush.msra.mxu0 %v84
    %v86 = vand.u32 %v56, 4294901760
    %87 = vmatpush.msra.mxu0 %v86
    %v88 = vand.u32 %v55, 4294901760
    %89 = vmatpush.msra.mxu0 %v88
    %v90 = vand.u32 %v65, 4294901760
    %v91 = vsub.f32 %v65, %v90
    %v92 = vand.u32 %v91, 4294901760
    %v93 = vsub.f32 %v91, %v92
    %v94 = vand.u32 %v93, 4294901760
    %95 = vmatmul.f32.gmra.mxu0 %v94
    %v96 = vpop.f32.mrf.mxu0
    %v97 = vadd.f32 %v61, %v96
    %v98 = vand.u32 %v68, 4294901760
    %v99 = vsub.f32 %v68, %v98
    %v100 = vand.u32 %v99, 4294901760
    %v101 = vsub.f32 %v99, %v100
    %v102 = vand.u32 %v101, 4294901760
    %103 = vmatmul.f32.gmra.mxu0 %v102
    %v104 = vpop.f32.mrf.mxu0
    %v105 = vadd.f32 %v62, %v104
    %106 = vdwg.mxu0
    %107 = vmatpush.msra.mxu0 0.0
    %108 = vmatpush.msra.mxu0 0.0
    %109 = vmatpush.msra.mxu0 0.0
    %110 = vmatpush.msra.mxu0 0.0
    %111 = vmatpush.msra.mxu0 0.0
    %112 = vmatpush.msra.mxu0 0.0
    %113 = vmatpush.msra.mxu0 0.0
    %114 = vmatpush.msra.mxu0 0.0
    %115 = vmatpush.msra.mxu0 0.0
    %116 = vmatpush.msra.mxu0 0.0
    %117 = vmatpush.msra.mxu0 0.0
    %118 = vmatpush.msra.mxu0 0.0
    %v119 = vand.u32 %v58, 4294901760
    %v120 = vsub.f32 %v58, %v119
    %v121 = vand.u32 %v120, 4294901760
    %v122 = vsub.f32 %v120, %v121
    %v123 = vand.u32 %v122, 4294901760
    %124 = vmatpush.msra.mxu0 %v123
    %v125 = vand.u32 %v57, 4294901760
    %v126 = vsub.f32 %v57, %v125
    %v127 = vand.u32 %v126, 4294901760
    %v128 = vsub.f32 %v126, %v127
    %v129 = vand.u32 %v128, 4294901760
    %130 = vmatpush.msra.mxu0 %v129
    %v131 = vand.u32 %v56, 4294901760
    %v132 = vsub.f32 %v56, %v131
    %v133 = vand.u32 %v132, 4294901760
    %v134 = vsub.f32 %v132, %v133
    %v135 = vand.u32 %v134, 4294901760
    %136 = vmatpush.msra.mxu0 %v135
    %v137 = vand.u32 %v55, 4294901760
    %v138 = vsub.f32 %v55, %v137
    %v139 = vand.u32 %v138, 4294901760
    %v140 = vsub.f32 %v138, %v139
    %v141 = vand.u32 %v140, 4294901760
    %142 = vmatpush.msra.mxu0 %v141
    %v143 = vand.u32 %v65, 4294901760
    %144 = vmatmul.f32.gmra.mxu0 %v143
    %v145 = vpop.f32.mrf.mxu0
    %v146 = vadd.f32 %v97, %v145
    %v147 = vand.u32 %v68, 4294901760
    %148 = vmatmul.f32.gmra.mxu0 %v147
    %v149 = vpop.f32.mrf.mxu0
    %v150 = vadd.f32 %v105, %v149
    %151 = vdwg.mxu0
    %152 = vmatpush.msra.mxu0 0.0
    %153 = vmatpush.msra.mxu0 0.0
    %154 = vmatpush.msra.mxu0 0.0
    %155 = vmatpush.msra.mxu0 0.0
    %156 = vmatpush.msra.mxu0 0.0
    %157 = vmatpush.msra.mxu0 0.0
    %158 = vmatpush.msra.mxu0 0.0
    %159 = vmatpush.msra.mxu0 0.0
    %160 = vmatpush.msra.mxu0 0.0
    %161 = vmatpush.msra.mxu0 0.0
    %162 = vmatpush.msra.mxu0 0.0
    %163 = vmatpush.msra.mxu0 0.0
    %v164 = vand.u32 %v58, 4294901760
    %v165 = vsub.f32 %v58, %v164
    %166 = vmatpush.msra.mxu0 %v165
    %v167 = vand.u32 %v57, 4294901760
    %v168 = vsub.f32 %v57, %v167
    %169 = vmatpush.msra.mxu0 %v168
    %v170 = vand.u32 %v56, 4294901760
    %v171 = vsub.f32 %v56, %v170
    %172 = vmatpush.msra.mxu0 %v171
    %v173 = vand.u32 %v55, 4294901760
    %v174 = vsub.f32 %v55, %v173
    %175 = vmatpush.msra.mxu0 %v174
    %v176 = vand.u32 %v65, 4294901760
    %v177 = vsub.f32 %v65, %v176
    %178 = vmatmul.f32.gmra.mxu0 %v177
    %v179 = vpop.f32.mrf.mxu0
    %v180 = vadd.f32 %v146, %v179
    %v181 = vand.u32 %v68, 4294901760
    %v182 = vsub.f32 %v68, %v181
    %183 = vmatmul.f32.gmra.mxu0 %v182
    %v184 = vpop.f32.mrf.mxu0
    %v185 = vadd.f32 %v150, %v184
    %186 = vdwg.mxu0
    %187 = vmatpush.msra.mxu0 0.0
    %188 = vmatpush.msra.mxu0 0.0
    %189 = vmatpush.msra.mxu0 0.0
    %190 = vmatpush.msra.mxu0 0.0
    %191 = vmatpush.msra.mxu0 0.0
    %192 = vmatpush.msra.mxu0 0.0
    %193 = vmatpush.msra.mxu0 0.0
    %194 = vmatpush.msra.mxu0 0.0
    %195 = vmatpush.msra.mxu0 0.0
    %196 = vmatpush.msra.mxu0 0.0
    %197 = vmatpush.msra.mxu0 0.0
    %198 = vmatpush.msra.mxu0 0.0
    %v199 = vand.u32 %v58, 4294901760
    %200 = vmatpush.msra.mxu0 %v199
    %v201 = vand.u32 %v57, 4294901760
    %202 = vmatpush.msra.mxu0 %v201
    %v203 = vand.u32 %v56, 4294901760
    %204 = vmatpush.msra.mxu0 %v203
    %v205 = vand.u32 %v55, 4294901760
    %206 = vmatpush.msra.mxu0 %v205
    %v207 = vand.u32 %v65, 4294901760
    %v208 = vsub.f32 %v65, %v207
    %v209 = vand.u32 %v208, 4294901760
    %210 = vmatmul.f32.gmra.mxu0 %v209
    %v211 = vpop.f32.mrf.mxu0
    %v212 = vadd.f32 %v180, %v211
    %v213 = vand.u32 %v68, 4294901760
    %v214 = vsub.f32 %v68, %v213
    %v215 = vand.u32 %v214, 4294901760
    %216 = vmatmul.f32.gmra.mxu0 %v215
    %v217 = vpop.f32.mrf.mxu0
    %v218 = vadd.f32 %v185, %v217
    %219 = vdwg.mxu0
    %220 = vmatpush.msra.mxu0 0.0
    %221 = vmatpush.msra.mxu0 0.0
    %222 = vmatpush.msra.mxu0 0.0
    %223 = vmatpush.msra.mxu0 0.0
    %224 = vmatpush.msra.mxu0 0.0
    %225 = vmatpush.msra.mxu0 0.0
    %226 = vmatpush.msra.mxu0 0.0
    %227 = vmatpush.msra.mxu0 0.0
    %228 = vmatpush.msra.mxu0 0.0
    %229 = vmatpush.msra.mxu0 0.0
    %230 = vmatpush.msra.mxu0 0.0
    %231 = vmatpush.msra.mxu0 0.0
    %v232 = vand.u32 %v58, 4294901760
    %v233 = vsub.f32 %v58, %v232
    %v234 = vand.u32 %v233, 4294901760
    %235 = vmatpush.msra.mxu0 %v234
    %v236 = vand.u32 %v57, 4294901760
    %v237 = vsub.f32 %v57, %v236
    %v238 = vand.u32 %v237, 4294901760
    %239 = vmatpush.msra.mxu0 %v238
    %v240 = vand.u32 %v56, 4294901760
    %v241 = vsub.f32 %v56, %v240
    %v242 = vand.u32 %v241, 4294901760
    %243 = vmatpush.msra.mxu0 %v242
    %v244 = vand.u32 %v55, 4294901760
    %v245 = vsub.f32 %v55, %v244
    %v246 = vand.u32 %v245, 4294901760
    %247 = vmatpush.msra.mxu0 %v246
    %v248 = vand.u32 %v65, 4294901760
    %249 = vmatmul.f32.gmra.mxu0 %v248
    %v250 = vpop.f32.mrf.mxu0
    %v251 = vadd.f32 %v212, %v250
    %v252 = vand.u32 %v68, 4294901760
    %253 = vmatmul.f32.gmra.mxu0 %v252
    %v254 = vpop.f32.mrf.mxu0
    %v255 = vadd.f32 %v218, %v254
    %256 = vdwg.mxu0
    %257 = vmatpush.msra.mxu0 0.0
    %258 = vmatpush.msra.mxu0 0.0
    %259 = vmatpush.msra.mxu0 0.0
    %260 = vmatpush.msra.mxu0 0.0
    %261 = vmatpush.msra.mxu0 0.0
    %262 = vmatpush.msra.mxu0 0.0
    %263 = vmatpush.msra.mxu0 0.0
    %264 = vmatpush.msra.mxu0 0.0
    %265 = vmatpush.msra.mxu0 0.0
    %266 = vmatpush.msra.mxu0 0.0
    %267 = vmatpush.msra.mxu0 0.0
    %268 = vmatpush.msra.mxu0 0.0
    %v269 = vand.u32 %v58, 4294901760
    %270 = vmatpush.msra.mxu0 %v269
    %v271 = vand.u32 %v57, 4294901760
    %272 = vmatpush.msra.mxu0 %v271
    %v273 = vand.u32 %v56, 4294901760
    %274 = vmatpush.msra.mxu0 %v273
    %v275 = vand.u32 %v55, 4294901760
    %276 = vmatpush.msra.mxu0 %v275
    %v277 = vand.u32 %v65, 4294901760
    %278 = vmatmul.f32.gmra.mxu0 %v277
    %v279 = vpop.f32.mrf.mxu0
    %v280 = vadd.f32 %v251, %v279
    %v281 = vand.u32 %v68, 4294901760
    %282 = vmatmul.f32.gmra.mxu0 %v281
    %v283 = vpop.f32.mrf.mxu0
    %v284 = vadd.f32 %v255, %v283
    %285 = vdwg.mxu0
    %286 = vst [vmem:[#allocation5] sm:$0xff] %v280
    %287 = vst [vmem:[#allocation5 + $0x8] sm:$0xff] %v284
    // Predicated region
    $region18: #{tpu_custom_call.1} parent=1 // pred_check
      _
    $region19: #{tpu_custom_call.1} parent=1 // pred_check_branch
      %289 = sbr.rel (0) target = $region21
    $region20: #{tpu_custom_call.1} parent=1 // pred_region
      %291 = vsyncadd [#allocation4], 0
      %s292 = sshll.u32 [#allocation5], 4
      %s293 = int_to_ptr.vmem [resolvable:$true] %s292
      %s294 = sshll.u32 %s3, 4
      %s295 = int_to_ptr.hbm [resolvable:$true] %s294
      %300 = dma.vmem_to_hbm [thread:$0]  %s293, 256, %s295, [#allocation4], 128, 128, 8
    $region21: #{tpu_custom_call.1} parent=1 // pred_fallthru
      _
    // Predicated region
    $region22: #{tpu_custom_call.1} parent=1 // pred_check
      _
    $region23: #{tpu_custom_call.1} parent=1 // pred_check_branch
      %302 = sbr.rel (0) target = $region25
    $region24: #{tpu_custom_call.1} parent=1 // pred_region
      %304 = dma.done [#allocation4], 256
    $region25: #{tpu_custom_call.1} parent=1 // pred_fallthru
      _
    %305 = vsyncpa [#allocation3], 1
    %306 = vsyncpa [#allocation4], 1

</llo_original>
